<compile_context>
chip_gen: v7x
topology: tpu7x:2x2x1
jax: 0.10.0
libtpu: 0.0.40
codegen_flags: <defaults>
</compile_context>

<pallas_src>
import math

import jax
import jax.numpy as jnp
from jax.experimental import pallas as pl
from jax.experimental.pallas import tpu as pltpu


# ---------------------------------------------------------------------------
# Kernels
# ---------------------------------------------------------------------------

def _hidden_to_column(x_ref, w1_ref, b1_ref, w2_ref, b2_ref):
    """Fused Linear -> ReLU -> Linear on one batch tile; returns (TB, 1) f32."""
    # Cast in-kernel (VPU) so x is read from HBM only once, in the caller dtype.
    x = x_ref[...].astype(w1_ref.dtype)
    # Hidden layer on the MXU with f32 accumulation; bias + ReLU on the VPU.
    h = jnp.dot(x, w1_ref[...], preferred_element_type=jnp.float32)
    h = jnp.maximum(h + b1_ref[...], 0.0)
    # Output layer (out_features == 1): VPU multiply + XLU lane reduction, NOT a
    # degenerate N=1 MXU matmul (would waste 127/128 MXU columns for no gain).
    return jnp.sum(h * w2_ref[...], axis=-1, keepdims=True) + b2_ref[...]   # (TB, 1)


def _mlp_kernel_lane(x_ref, w1_ref, b1_ref, w2_ref, b2_ref, o_ref):
    """Lane-dense output: o_ref is a (1, TB) row block."""
    col = _hidden_to_column(x_ref, w1_ref, b1_ref, w2_ref, b2_ref)        # (TB, 1)
    # Sublane->lane relayout of the result column (XLU transpose; XLU is idle)
    # so the store is an unmasked, lane-dense vst + a dense output DMA.
    o_ref[...] = jnp.transpose(col, (1, 0)).astype(o_ref.dtype)           # (1, TB)


def _mlp_kernel_column(x_ref, w1_ref, b1_ref, w2_ref, b2_ref, o_ref):
    """Fallback layout: o_ref is a (TB, 1) column block."""
    o_ref[...] = _hidden_to_column(x_ref, w1_ref, b1_ref, w2_ref, b2_ref).astype(o_ref.dtype)


# ---------------------------------------------------------------------------
# Wrapper
# ---------------------------------------------------------------------------

def _derive_batch_tile(batch, d, x_itemsize, hidden, block_rows):
    """Largest batch tile that (a) respects block_rows, (b) keeps streamed VMEM
    state within ~24 MiB (safe on v7x's 64 MiB physical VMEM), (c) leaves >= 4
    grid steps when the batch allows (2 tiles per TensorCore on v7x)."""
    d_lanes = ((max(d, 1) + 127) // 128) * 128
    h_lanes = ((max(hidden, 1) + 127) // 128) * 128
    # Per-row VMEM bytes: double-buffered x block + f32 hidden intermediates
    # (h, h*w2, cast copy) + double-buffered f32 output row.
    per_row = 2 * d_lanes * x_itemsize + 3 * h_lanes * 4 + 8
    budget = 24 * 1024 * 1024
    tb = min(block_rows, max(8, budget // per_row))
    tb = min(tb, max(8, pl.cdiv(batch, 4)))       # keep >= 4 tiles for large batches
    return max(8, (tb // 8) * 8)


def neural_net_forward(x, params, *, block_rows=16384, compute_dtype=jnp.bfloat16,
                       lane_dense_out=True):
    """Fused MLP forward; returns shape (batch,) like PyTorch's .squeeze(1).

    x      : (batch, input_dim) array (f32 or bf16); streamed from HBM as-is.
    params : (w1 (D, 64), b1 (1, 64), w2 (1, 64), b2 (1, 1)), all f32.
             w1 is stored (in_features, out_features), i.e. transposed vs PyTorch;
             w2 keeps PyTorch's Linear(64, 1).weight layout (1, 64).
    """
    w1, b1, w2, b2 = params
    batch, d = x.shape
    hidden = w1.shape[1]
    x_itemsize = jnp.dtype(x.dtype).itemsize

    tb = _derive_batch_tile(batch, d, x_itemsize, hidden, block_rows)
    num_tiles = pl.cdiv(batch, tb)   # ragged last tile: rows >= batch are discarded

    # Resident hidden-layer weight in the compute dtype (tiny, one-time cast);
    # biases and the layer-2 weight row stay f32.
    w1_c = w1.astype(compute_dtype)

    in_specs = [
        pl.BlockSpec((tb, d), lambda i: (i, 0)),          # x : streamed batch tiles
        pl.BlockSpec((d, hidden), lambda i: (0, 0)),      # w1: VMEM-resident
        pl.BlockSpec((1, hidden), lambda i: (0, 0)),      # b1: resident
        pl.BlockSpec((1, hidden), lambda i: (0, 0)),      # w2: resident
        pl.BlockSpec((1, 1), lambda i: (0, 0)),           # b2: resident
    ]
    # TODO(synk): if a trace shows exposed x DMA, add pipeline_mode=pl.Buffered(3)
    # to in_specs[0] (costs extra VMEM, re-check the v7x budget first).

    if lane_dense_out:
        kernel = _mlp_kernel_lane
        out_shape = jax.ShapeDtypeStruct((num_tiles, tb), jnp.float32)
        out_spec = pl.BlockSpec((1, tb), lambda i: (i, 0))
    else:
        kernel = _mlp_kernel_column
        out_shape = jax.ShapeDtypeStruct((num_tiles * tb, 1), jnp.float32)
        out_spec = pl.BlockSpec((tb, 1), lambda i: (i, 0))

    d_lanes = ((d + 127) // 128) * 128
    h_lanes = ((hidden + 127) // 128) * 128
    vmem_est = (2 * tb * d_lanes * x_itemsize     # x double buffer
                + 3 * tb * h_lanes * 4            # hidden intermediates (f32)
                + 4 * tb * 4                      # output buffers
                + 2 * d_lanes * h_lanes * 4       # resident w1 (+ copy)
                + (1 << 20))                      # biases / slack
    vmem_limit = int(min(48 * 1024 * 1024, max(32 * 1024 * 1024, vmem_est)))

    out = pl.pallas_call(
        kernel,
        out_shape=out_shape,
        grid=(num_tiles,),
        in_specs=in_specs,
        out_specs=out_spec,
        compiler_params=pltpu.CompilerParams(
            dimension_semantics=("parallel",),    # independent batch tiles (megacore)
            vmem_limit_bytes=vmem_limit,          # v5e default scoped VMEM is 16 MiB
        ),
    )(x, w1_c, b1, w2, b2)

    # squeeze(1) + drop the ragged-tile tail (cheap slice over ~4*batch bytes).
    return out.reshape(-1)[:batch]


# ---------------------------------------------------------------------------
# Reference / init
# ---------------------------------------------------------------------------

def init_params(key, input_dim, hidden=64):
    """nn.Linear-style init U(-1/sqrt(fan_in), +1/sqrt(fan_in)).  w1 stored
    (in_features, out_features); w2 as (1, hidden); biases as (1, out_features)."""
    k1, k2, k3, k4 = jax.random.split(key, 4)
    bound1 = 1.0 / math.sqrt(input_dim)
    bound2 = 1.0 / math.sqrt(hidden)
    w1 = jax.random.uniform(k1, (input_dim, hidden), jnp.float32, -bound1, bound1)
    b1 = jax.random.uniform(k2, (1, hidden), jnp.float32, -bound1, bound1)
    w2 = jax.random.uniform(k3, (1, hidden), jnp.float32, -bound2, bound2)
    b2 = jax.random.uniform(k4, (1, 1), jnp.float32, -bound2, bound2)
    return w1, b1, w2, b2


def reference_forward(x, params):
    """Pure-JAX f32 reference for correctness checking."""
    w1, b1, w2, b2 = params
    h = jnp.maximum(x.astype(jnp.float32) @ w1 + b1, 0.0)
    return (jnp.sum(h * w2, axis=-1, keepdims=True) + b2)[:, 0]


if __name__ == "__main__":
    key = jax.random.PRNGKey(0)
    k_param, k_x, k_x2 = jax.random.split(key, 3)

    batch, input_dim = 8, 32
    params = init_params(k_param, input_dim)
    x = jax.random.normal(k_x, (batch, input_dim), jnp.float32)
    ref = reference_forward(x, params)

    # Ragged multi-tile case (batch not a multiple of the tile).
    batch2 = 20
    x2 = jax.random.normal(k_x2, (batch2, input_dim), jnp.float32)
    ref2 = reference_forward(x2, params)

    # Probe the lane-dense output layout (unmasked stores + dense output DMA).
    # If the in-kernel sublane->lane relayout does not lower (or miscompares)
    # on this toolchain, fall back to the column layout — a perf-only change.
    try:
        probe = jax.block_until_ready(
            neural_net_forward(x2, params, block_rows=8,
                               compute_dtype=jnp.float32, lane_dense_out=True))
        lane_dense = bool(jnp.allclose(probe, ref2, atol=1e-5, rtol=1e-5))
    except Exception:
        lane_dense = False

    # 1) f32 compute path — tight tolerance.
    pred_f32 = jax.block_until_ready(
        neural_net_forward(x, params, compute_dtype=jnp.float32,
                           lane_dense_out=lane_dense))
    assert pred_f32.shape == (batch,), pred_f32.shape
    assert jnp.allclose(pred_f32, ref, atol=1e-5, rtol=1e-5), (pred_f32, ref)

    # 2) bf16 hidden-matmul path (default) — looser tolerance for bf16 rounding.
    pred_bf16 = jax.block_until_ready(
        neural_net_forward(x, params, lane_dense_out=lane_dense))
    assert pred_bf16.shape == (batch,), pred_bf16.shape
    assert jnp.allclose(pred_bf16, ref, atol=3e-2, rtol=3e-2), (pred_bf16, ref)

    # 3) Ragged multi-tile grid (no jnp.pad: garbage tail rows are sliced off).
    pred2 = jax.block_until_ready(
        neural_net_forward(x2, params, block_rows=8, compute_dtype=jnp.float32,
                           lane_dense_out=lane_dense))
    assert pred2.shape == (batch2,), pred2.shape
    assert jnp.allclose(pred2, ref2, atol=1e-5, rtol=1e-5), (pred2, ref2)

    # TODO(synk): cal_loss (MSE + L2-norm regularization over parameters) is a
    # training-time utility, not part of forward(); it is not implemented here.
    print("KERNEL_OK")
</pallas_src>

<mosaic_0001>
module attributes {stable_mosaic.version = 11 : i64} {
  func.func @_mlp_kernel_column(%arg0: i32, %arg1: memref<8x32xf32, #tpu.memory_space<vmem>>, %arg2: memref<32x64xf32, #tpu.memory_space<vmem>>, %arg3: memref<1x64xf32, #tpu.memory_space<vmem>>, %arg4: memref<1x64xf32, #tpu.memory_space<vmem>>, %arg5: memref<1x1xf32, #tpu.memory_space<vmem>>, %arg6: memref<8x1xf32, #tpu.memory_space<vmem>>) attributes {dimension_semantics = [#tpu.dimension_semantics<parallel>], iteration_bounds = array<i64: 1>, scalar_prefetch = 0 : i64, scratch_operands = 0 : i64, tpu.core_type = #tpu.core_type<tc>, window_params = [{transform_indices = @transform_0, window_bounds = array<i64: 8, 32>}, {pipeline_mode = #tpu.pipeline_mode<synchronous>, transform_indices = @transform_1, window_bounds = array<i64: 32, 64>}, {pipeline_mode = #tpu.pipeline_mode<synchronous>, transform_indices = @transform_2, window_bounds = array<i64: 1, 64>}, {pipeline_mode = #tpu.pipeline_mode<synchronous>, transform_indices = @transform_3, window_bounds = array<i64: 1, 64>}, {pipeline_mode = #tpu.pipeline_mode<synchronous>, transform_indices = @transform_4, window_bounds = array<i64: 1, 1>}, {transform_indices = @transform_5, window_bounds = array<i64: 8, 1>}]} {
    %c0 = arith.constant 0 : index
    %c0_0 = arith.constant 0 : index
    %0 = vector.load %arg1[%c0, %c0_0] : memref<8x32xf32, #tpu.memory_space<vmem>>, vector<8x32xf32>
    %c0_1 = arith.constant 0 : index
    %c0_2 = arith.constant 0 : index
    %1 = vector.load %arg2[%c0_1, %c0_2] : memref<32x64xf32, #tpu.memory_space<vmem>>, vector<32x64xf32>
    %cst = arith.constant dense<0.000000e+00> : vector<8x64xf32>
    %2 = tpu.matmul %0, %1, %cst {dimension_numbers = #tpu.dot_dimension_numbers<[1], [0], [0], [1], [0, 0, 1, 1], [], []>} : vector<8x32xf32>, vector<32x64xf32>, vector<8x64xf32> -> vector<8x64xf32>
    %c0_3 = arith.constant 0 : index
    %c0_4 = arith.constant 0 : index
    %3 = vector.load %arg3[%c0_3, %c0_4] : memref<1x64xf32, #tpu.memory_space<vmem>>, vector<1x64xf32>
    %4 = vector.broadcast %3 : vector<1x64xf32> to vector<8x64xf32>
    %5 = arith.addf %2, %4 : vector<8x64xf32>
    %cst_5 = arith.constant 0.000000e+00 : f32
    %6 = vector.broadcast %cst_5 : f32 to vector<8x64xf32>
    %7 = arith.maximumf %5, %6 : vector<8x64xf32>
    %c0_6 = arith.constant 0 : index
    %c0_7 = arith.constant 0 : index
    %8 = vector.load %arg4[%c0_6, %c0_7] : memref<1x64xf32, #tpu.memory_space<vmem>>, vector<1x64xf32>
    %9 = vector.broadcast %8 : vector<1x64xf32> to vector<8x64xf32>
    %10 = arith.mulf %7, %9 : vector<8x64xf32>
    %cst_8 = arith.constant dense<0.000000e+00> : vector<8xf32>
    %11 = vector.multi_reduction <add>, %10, %cst_8 [1] : vector<8x64xf32> to vector<8xf32>
    %12 = vector.shape_cast %11 : vector<8xf32> to vector<8x1xf32>
    %c0_9 = arith.constant 0 : index
    %c0_10 = arith.constant 0 : index
    %13 = vector.load %arg5[%c0_9, %c0_10] : memref<1x1xf32, #tpu.memory_space<vmem>>, vector<1x1xf32>
    %14 = vector.broadcast %13 : vector<1x1xf32> to vector<8x1xf32>
    %15 = arith.addf %12, %14 : vector<8x1xf32>
    %c0_11 = arith.constant 0 : index
    %c0_12 = arith.constant 0 : index
    %16 = vector.load %arg6[%c0_11, %c0_12] : memref<8x1xf32, #tpu.memory_space<vmem>>, vector<8x1xf32>
    tpu.vector_store %arg6[%c0_11, %c0_12], %15 {strides = array<i32>} : memref<8x1xf32, #tpu.memory_space<vmem>>, vector<8x1xf32>,
    return
  }
  func.func @transform_0(%arg0: i32) -> (i32, i32) {
    %c0_i32 = arith.constant 0 : i32
    %c0_i32_0 = arith.constant 0 : i32
    return %arg0, %c0_i32 : i32, i32
  }
  func.func @transform_1(%arg0: i32) -> (i32, i32) {
    %c0_i32 = arith.constant 0 : i32
    %c0_i32_0 = arith.constant 0 : i32
    %c0_i32_1 = arith.constant 0 : i32
    return %c0_i32, %c0_i32_0 : i32, i32
  }
  func.func @transform_2(%arg0: i32) -> (i32, i32) {
    %c0_i32 = arith.constant 0 : i32
    %c0_i32_0 = arith.constant 0 : i32
    %c0_i32_1 = arith.constant 0 : i32
    return %c0_i32, %c0_i32_0 : i32, i32
  }
  func.func @transform_3(%arg0: i32) -> (i32, i32) {
    %c0_i32 = arith.constant 0 : i32
    %c0_i32_0 = arith.constant 0 : i32
    %c0_i32_1 = arith.constant 0 : i32
    return %c0_i32, %c0_i32_0 : i32, i32
  }
  func.func @transform_4(%arg0: i32) -> (i32, i32) {
    %c0_i32 = arith.constant 0 : i32
    %c0_i32_0 = arith.constant 0 : i32
    %c0_i32_1 = arith.constant 0 : i32
    return %c0_i32, %c0_i32_0 : i32, i32
  }
  func.func @transform_5(%arg0: i32) -> (i32, i32) {
    %c0_i32 = arith.constant 0 : i32
    %c0_i32_0 = arith.constant 0 : i32
    return %arg0, %c0_i32 : i32, i32
  }
}

</mosaic_0001>

<llo_original>
// kernel: tpu_custom_call.1
$region0: #{tpu_custom_call.1}
  #allocation0 [shape = 'u32[]', space=smem, size = 0x4, offset = 0x4, fixed_abs, tag = 'smem constant byte address 0x4 - core index']
  #allocation1 [shape = 'u32[144,128]{1,0:T(1,128)}', space=vmem, size = 0x12000, scoped, tag = 'internal scratch']
  #allocation2 [shape = 'f32[1,1]{1,0:T(1,128)S(1)}', space=vmem, size = 0x200, scoped, tag = 'scoped memory for tpu_custom_call.1']
  %s0 = inlined_call_operand.hbm [shape: f32[8,32], index: 0, kind: input, shape index: {}]
  %s1 = inlined_call_operand.hbm [shape: f32[32,64], index: 1, kind: input, shape index: {}]
  %s2 = inlined_call_operand.vmem [shape: f32[1,64], index: 2, kind: input, shape index: {}]
  %s3 = inlined_call_operand.vmem [shape: f32[1,64], index: 3, kind: input, shape index: {}]
  %s4 = inlined_call_operand.<no memory space> [shape: f32[1,1], index: 4, kind: input, shape index: {}]
  %s5 = inlined_call_operand.vmem [shape: f32[8,1], index: 5, kind: output, shape index: {}]
  %s6 = sld [smem:[#allocation0]]
  $region38: #{tpu_custom_call.1} parent=0
    _
  %s8 = ssub.s32 1, %s6
  %s9 = scalar_select 0, %s8, %s6
  %v10 = vstv %s4
  %11 = vst [vmem:[#allocation2] sm:$0x1] %v10
  $region1: #{tpu_custom_call.1} parent=0
    #allocation3 [shape = 'u8[4096]{0}', space=vmem, size = 0x1000, scoped, tag = 'input window, operand 0, single buffered']
    #allocation4 [shape = 's32[1]{0}', space=sflag, size = 0x4, scoped, tag = 'scoped memory for tpu_custom_call.1']
    #allocation5 [shape = 'u8[16384]{0}', space=vmem, size = 0x4000, scoped, tag = 'input window, operand 1, single buffered']
    #allocation6 [shape = 's32[1]{0}', space=sflag, size = 0x4, scoped, tag = 'scoped memory for tpu_custom_call.1']
    %12 = vsyncpa [#allocation4], 0
    %13 = vsyncpa [#allocation6], 0
    // Predicated region
    $region2: #{tpu_custom_call.1} parent=1 // pred_check
      _
    $region3: #{tpu_custom_call.1} parent=1 // pred_check_branch
      %15 = sbr.rel (0) target = $region5
    $region4: #{tpu_custom_call.1} parent=1 // pred_region
      %s17 = ssub.s32 128, 128
      %18 = vsyncadd [#allocation4], %s17
      %s20 = sshll.u32 [#allocation3], 4
      %s21 = int_to_ptr.vmem [resolvable:$true] %s20
      %23 = dma.hbm_to_vmem [thread:$0]  %s0, 128, %s21, [#allocation4]
    $region5: #{tpu_custom_call.1} parent=1 // pred_fallthru
      _
    // Predicated region
    $region6: #{tpu_custom_call.1} parent=1 // pred_check
      _
    $region7: #{tpu_custom_call.1} parent=1 // pred_check_branch
      %25 = sbr.rel (0) target = $region9
    $region8: #{tpu_custom_call.1} parent=1 // pred_region
      %s27 = ssub.s32 512, 512
      %28 = vsyncadd [#allocation6], %s27
      %s29 = sshll.u32 [#allocation5], 4
      %s30 = int_to_ptr.vmem [resolvable:$true] %s29
      %35 = dma.hbm_to_vmem [thread:$0]  %s1, 512, %s30, [#allocation6], 128, 128, 8
    $region9: #{tpu_custom_call.1} parent=1 // pred_fallthru
      _
    // Predicated region
    $region10: #{tpu_custom_call.1} parent=1 // pred_check
      _
    $region11: #{tpu_custom_call.1} parent=1 // pred_check_branch
      %37 = sbr.rel (0) target = $region13
    $region12: #{tpu_custom_call.1} parent=1 // pred_region
      _
    $region13: #{tpu_custom_call.1} parent=1 // pred_fallthru
      _
    // Predicated region
    $region14: #{tpu_custom_call.1} parent=1 // pred_check
      _
    $region15: #{tpu_custom_call.1} parent=1 // pred_check_branch
      %39 = sbr.rel (0) target = $region17
    $region16: #{tpu_custom_call.1} parent=1 // pred_region
      _
    $region17: #{tpu_custom_call.1} parent=1 // pred_fallthru
      _
    // Predicated region
    $region18: #{tpu_custom_call.1} parent=1 // pred_check
      _
    $region19: #{tpu_custom_call.1} parent=1 // pred_check_branch
      %41 = sbr.rel (0) target = $region21
    $region20: #{tpu_custom_call.1} parent=1 // pred_region
      _
    $region21: #{tpu_custom_call.1} parent=1 // pred_fallthru
      _
    // Predicated region
    $region22: #{tpu_custom_call.1} parent=1 // pred_check
      _
    $region23: #{tpu_custom_call.1} parent=1 // pred_check_branch
      %43 = sbr.rel (0) target = $region25
    $region24: #{tpu_custom_call.1} parent=1 // pred_region
      %44 = dma.done [#allocation4], 128
    $region25: #{tpu_custom_call.1} parent=1 // pred_fallthru
      _
    // Predicated region
    $region26: #{tpu_custom_call.1} parent=1 // pred_check
      _
    $region27: #{tpu_custom_call.1} parent=1 // pred_check_branch
      %46 = sbr.rel (0) target = $region29
    $region28: #{tpu_custom_call.1} parent=1 // pred_region
      %47 = dma.done [#allocation6], 512
    $region29: #{tpu_custom_call.1} parent=1 // pred_fallthru
      _
    %v48 = vld [vmem:[#allocation3] sm:$0xff]
    %v49 = vld [vmem:[#allocation5] sm:$0xff]
    %v50 = vld [vmem:[#allocation5 + $0x8] sm:$0xff]
    %v51 = vld [vmem:[#allocation5 + $0x10] sm:$0xff]
    %v52 = vld [vmem:[#allocation5 + $0x18] sm:$0xff]
    %v53 = vld [vmem:[%s2] sm:$0x1]
    %v55 = vlaneseq
    %v56 = vshrl.u32 %v55, 7
    %v57 = vsub.s32 0, %v56
    %v58 = vrot.slane %v53, %v57
    %vm60 = vcmask 261120
    %v62 = vsel %vm60, %v48, 0
    %64 = vmatprep.subr.mxu0 0.0
    %65 = vmatpush1.msra.mxu0 %v49
    %66 = vmatprep.subr.mxu0 0.0
    %67 = vmatpush1.msra.mxu0 %v50
    %68 = vmatprep.subr.mxu0 0.0
    %69 = vmatpush1.msra.mxu0 %v51
    %70 = vmatprep.subr.mxu0 0.0
    %71 = vmatpush1.msra.mxu0 %v52
    %72 = vmatprep.subr.mxu0 0.0
    %73 = vmatpush1.msra.mxu0 0.0
    %74 = vmatprep.subr.mxu0 0.0
    %75 = vmatpush1.msra.mxu0 0.0
    %76 = vmatprep.subr.mxu0 0.0
    %77 = vmatpush1.msra.mxu0 0.0
    %78 = vmatprep.subr.mxu0 0.0
    %79 = vmatpush1.msra.mxu0 0.0
    %80 = vmatprep.subr.mxu0 0.0
    %81 = vmatpush1.msra.mxu0 0.0
    %82 = vmatprep.subr.mxu0 0.0
    %83 = vmatpush1.msra.mxu0 0.0
    %84 = vmatprep.subr.mxu0 0.0
    %85 = vmatpush1.msra.mxu0 0.0
    %86 = vmatprep.subr.mxu0 0.0
    %87 = vmatpush1.msra.mxu0 0.0
    %88 = vmatprep.subr.mxu0 0.0
    %89 = vmatpush1.msra.mxu0 0.0
    %90 = vmatprep.subr.mxu0 0.0
    %91 = vmatpush1.msra.mxu0 0.0
    %92 = vmatprep.subr.mxu0 0.0
    %93 = vmatpush1.msra.mxu0 0.0
    %94 = vmatprep.subr.mxu0 0.0
    %95 = vmatpush1.msra.mxu0 0.0
    %96 = vmatprep.subr.mxu0 0.0
    %97 = vmatpush1.msra.mxu0 0.0
    %98 = vmatprep.subr.mxu0 0.0
    %99 = vmatpush1.msra.mxu0 0.0
    %100 = vmatprep.subr.mxu0 0.0
    %101 = vmatpush1.msra.mxu0 0.0
    %102 = vmatprep.subr.mxu0 0.0
    %103 = vmatpush1.msra.mxu0 0.0
    %104 = vmatprep.subr.mxu0 0.0
    %105 = vmatpush1.msra.mxu0 0.0
    %106 = vmatprep.subr.mxu0 0.0
    %107 = vmatpush1.msra.mxu0 0.0
    %108 = vmatprep.subr.mxu0 0.0
    %109 = vmatpush1.msra.mxu0 0.0
    %110 = vmatprep.subr.mxu0 0.0
    %111 = vmatpush1.msra.mxu0 0.0
    %112 = vmatprep.subr.mxu0 0.0
    %113 = vmatpush1.msra.mxu0 0.0
    %114 = vmatprep.subr.mxu0 0.0
    %115 = vmatpush1.msra.mxu0 0.0
    %116 = vmatprep.subr.mxu0 0.0
    %117 = vmatpush1.msra.mxu0 0.0
    %118 = vmatprep.subr.mxu0 0.0
    %119 = vmatpush1.msra.mxu0 0.0
    %120 = vmatprep.subr.mxu0 0.0
    %121 = vmatpush1.msra.mxu0 0.0
    %122 = vmatprep.subr.mxu0 0.0
    %123 = vmatpush1.msra.mxu0 0.0
    %124 = vmatprep.subr.mxu0 0.0
    %125 = vmatpush1.msra.mxu0 0.0
    %126 = vmatprep.subr.mxu0 0.0
    %127 = vmatpush1.msra.mxu0 0.0
    %128 = vmatprep.mubr.f32.mxu0 0.0
    %129 = vmatmul.mubr.f32.gmra.mrb[0].mxu0 %v62
    %v130 = vpop.f32.mrb[0].mxu0
    %v131 = vadd.f32 %v58, %v130
    %v132 = vpop.f32.mrb[0].mxu0
    %133 = vdwg.mxu0
    %v134 = vmax.f32 %v131, 0.0
    %v135 = vld [vmem:[%s3] sm:$0x1]
    %v137 = vlaneseq
    %v138 = vshrl.u32 %v137, 7
    %v139 = vsub.s32 0, %v138
    %v140 = vrot.slane %v135, %v139
    %v142 = vmul.f32 %v134, %v140
    %vm143 = vcmask 523264
    %v144 = vsel %vm143, %v142, 0.0
    %145 = vadd.xlane.f32.xlu0 %v144
    %v146 = vpop.xlane.xlu0 %145
    %v147 = vld [vmem:[#allocation2] sm:$0x1]
    %v149 = vlaneseq
    %v150 = vshrl.u32 %v149, 7
    %v151 = vsub.s32 0, %v150
    %v152 = vrot.slane %v147, %v151
    %v154 = vadd.f32 %v146, %v152
    %vm155 = vcmask 7168
    %156 = vst.msk [vmem:[%s5] sm:$0xff] %vm155, %v154
    // Predicated region
    $region30: #{tpu_custom_call.1} parent=1 // pred_check
      _
    $region31: #{tpu_custom_call.1} parent=1 // pred_check_branch
      %158 = sbr.rel (0) target = $region33
    $region32: #{tpu_custom_call.1} parent=1 // pred_region
      _
    $region33: #{tpu_custom_call.1} parent=1 // pred_fallthru
      _
    // Predicated region
    $region34: #{tpu_custom_call.1} parent=1 // pred_check
      _
    $region35: #{tpu_custom_call.1} parent=1 // pred_check_branch
      %160 = sbr.rel (0) target = $region37
    $region36: #{tpu_custom_call.1} parent=1 // pred_region
      _
    $region37: #{tpu_custom_call.1} parent=1 // pred_fallthru
      _
    %161 = vsyncpa [#allocation4], 1
    %162 = vsyncpa [#allocation6], 1

</llo_original>
